<compile_context>
chip_gen: v7x
topology: tpu7x:2x2x1
jax: 0.10.0
libtpu: 0.0.40
codegen_flags: <defaults>
</compile_context>

<pallas_src>
from typing import Dict, List

import jax
import jax.numpy as jnp
from jax.experimental import pallas as pl
from jax.experimental.pallas import tpu as pltpu

_BLK_B = 8  # batch rows per output block (one full vreg of sublanes)


def _sender_kernel(didx_ref, table_ref, out_msg_ref):
    # didx_ref:   SMEM scalar-prefetch ref, (b_pad,) int32 derivation indices.
    # table_ref:  VMEM-resident full table, (n_pad, l_pad) int32, "+1" folded in.
    # out_msg_ref: VMEM output block, (_BLK_B, l_pad) int32.
    base = pl.program_id(0) * _BLK_B
    rows = [
        table_ref[pl.ds(didx_ref[base + r], 1), :]  # in-kernel row gather (1, l_pad)
        for r in range(_BLK_B)
    ]
    out_msg_ref[...] = jnp.concatenate(rows, axis=0)  # single dense (8, l_pad) store


def make_fixed_protocol_sender(protocol: Dict[str, List[str]],
                               vocab: Dict[str, int],
                               use_pallas: bool = True):
    """Build the sender from the protocol / vocab dicts (done once, host glue).

    Returns (sender_fn, derivation_to_index).
      sender_fn(derivation_idx: int32 scalar or [B] vector)
          -> (message [B, L] int32, zeros [B, L] f32, zeros [B, L] f32)
    """
    derivations = list(protocol.keys())
    deriv_to_idx = {d: i for i, d in enumerate(derivations)}
    n = len(derivations)
    msg_len = len(protocol[derivations[0]])
    for d in derivations:                      # fixed protocol => fixed length
        assert len(protocol[d]) == msg_len, "all messages must share one length"

    # Dense token table, "+1" folded in (keeps forward-pass output semantics).
    ids = jnp.asarray(
        [[vocab[s] for s in protocol[d]] for d in derivations], dtype=jnp.int32
    )
    l_pad = max(128, ((msg_len + 127) // 128) * 128)   # lane-dense last dim
    n_pad = max(_BLK_B, ((n + _BLK_B - 1) // _BLK_B) * _BLK_B)
    table = jnp.zeros((n_pad, l_pad), dtype=jnp.int32)
    table = table.at[:n, :msg_len].set(ids + 1)

    @jax.jit
    def sender(derivation_idx):
        didx = jnp.atleast_1d(jnp.asarray(derivation_idx, dtype=jnp.int32))
        b = didx.shape[0]                      # static under jit
        # NOTE: clamping silently maps out-of-range indices to valid rows,
        # whereas the PyTorch module would raise KeyError.
        didx = jnp.clip(didx, 0, n - 1)

        if not use_pallas:
            # Pure-XLA fast path (recommended for B == 1 in production: there is
            # zero compute, so skipping the Mosaic custom-call launch wins).
            message = table[didx, :msg_len]
            zeros = jnp.zeros((b, msg_len), dtype=jnp.float32)
            return message, zeros, zeros

        num_blocks = (b + _BLK_B - 1) // _BLK_B
        b_pad = num_blocks * _BLK_B
        didx_pad = jnp.zeros((b_pad,), dtype=jnp.int32).at[:b].set(didx)

        grid_spec = pltpu.PrefetchScalarGridSpec(
            num_scalar_prefetch=1,
            grid=(num_blocks,),
            in_specs=[
                # Whole table VMEM-resident; same block every step => one DMA.
                pl.BlockSpec((n_pad, l_pad), lambda i, d: (0, 0)),
            ],
            out_specs=pl.BlockSpec((_BLK_B, l_pad), lambda i, d: (i, 0)),
        )

        # Only ask for cross-TC sharding when there is more than one block of
        # work; a single ~4 KiB copy does not amortize the v7x split.
        compiler_params = pltpu.CompilerParams(
            dimension_semantics=(
                "parallel" if num_blocks >= 2 else "arbitrary",
            )
        )

        out = pl.pallas_call(
            _sender_kernel,
            grid_spec=grid_spec,
            out_shape=jax.ShapeDtypeStruct((b_pad, l_pad), jnp.int32),
            compiler_params=compiler_params,
            cost_estimate=pl.CostEstimate(
                flops=0,                        # pure data movement
                transcendentals=0,
                bytes_accessed=4 * (n_pad * l_pad + b_pad + b_pad * l_pad),
            ),
        )(didx_pad, table)

        message = out[:b, :msg_len]                          # [B, L] int32
        zeros = jnp.zeros((b, msg_len), dtype=jnp.float32)   # constant outputs
        return message, zeros, zeros

    return sender, deriv_to_idx


if __name__ == "__main__":
    key = jax.random.PRNGKey(0)

    # Deterministic synthetic "protocol" + "vocab":
    #   vocab: symbols "s0".."s9" -> ids 0..9
    #   protocol: 4 derivations, each a fixed message of 8 symbols.
    vocab_size, num_derivations, msg_len = 10, 4, 8
    vocab = {f"s{i}": i for i in range(vocab_size)}

    k_tbl, k_idx = jax.random.split(key)
    raw_ids = jax.random.randint(
        k_tbl, (num_derivations, msg_len), 0, vocab_size, dtype=jnp.int32
    )
    protocol = {
        f"d{r}": [f"s{int(raw_ids[r, c])}" for c in range(msg_len)]
        for r in range(num_derivations)
    }

    sender, deriv_to_idx = make_fixed_protocol_sender(protocol, vocab)

    # ---- Single-derivation call (matches the module's [1, L] outputs). ----
    d_name = f"d{int(jax.random.randint(k_idx, (), 0, num_derivations))}"
    d_idx = jnp.asarray([deriv_to_idx[d_name]], dtype=jnp.int32)  # stays on device
    msg, z0, z1 = sender(d_idx)
    jax.block_until_ready((msg, z0, z1))

    expected_msg = raw_ids[deriv_to_idx[d_name]][None, :] + 1
    assert msg.shape == (1, msg_len) and msg.dtype == jnp.int32
    assert bool(jnp.all(msg == expected_msg))
    assert z0.shape == (1, msg_len) and bool(jnp.all(z0 == 0.0))
    assert z1.shape == (1, msg_len) and bool(jnp.all(z1 == 0.0))

    # ---- Batched call: all derivations at once (one 8-row grid step). ----
    all_idx = jnp.arange(num_derivations, dtype=jnp.int32)
    msg_b, z0_b, z1_b = sender(all_idx)
    jax.block_until_ready((msg_b, z0_b, z1_b))
    assert msg_b.shape == (num_derivations, msg_len)
    assert bool(jnp.all(msg_b == raw_ids + 1))
    assert bool(jnp.all(z0_b == 0.0)) and bool(jnp.all(z1_b == 0.0))

    # ---- Larger batch (2 blocks of 8) exercises the "parallel" grid path. ----
    big_idx = jnp.concatenate([all_idx] * 4)                  # [16]
    msg_big, _, _ = sender(big_idx)
    jax.block_until_ready(msg_big)
    assert msg_big.shape == (16, msg_len)
    assert bool(jnp.all(msg_big == jnp.concatenate([raw_ids + 1] * 4, axis=0)))

    print("KERNEL_OK")
</pallas_src>

<mosaic_0001>
module attributes {stable_mosaic.version = 11 : i64} {
  func.func @_sender_kernel(%arg0: i32, %arg1: memref<8xi32, #tpu.memory_space<smem>>, %arg2: memref<8x128xi32, #tpu.memory_space<vmem>>, %arg3: memref<8x128xi32, #tpu.memory_space<vmem>>) attributes {dimension_semantics = [#tpu.dimension_semantics<arbitrary>], iteration_bounds = array<i64: 1>, scalar_prefetch = 1 : i64, scratch_operands = 0 : i64, tpu.core_type = #tpu.core_type<tc>, window_params = [{pipeline_mode = #tpu.pipeline_mode<synchronous>, transform_indices = @transform_0, window_bounds = array<i64: 8, 128>}, {transform_indices = @transform_1, window_bounds = array<i64: 8, 128>}]} {
    %c8_i32 = arith.constant 8 : i32
    %0 = arith.muli %arg0, %c8_i32 : i32
    %c0_i32 = arith.constant 0 : i32
    %1 = arith.addi %0, %c0_i32 : i32
    %2 = arith.index_cast %1 : i32 to index
    %3 = memref.load %arg1[%2] : memref<8xi32, #tpu.memory_space<smem>>
    %4 = arith.index_cast %3 : i32 to index
    %c0 = arith.constant 0 : index
    %5 = vector.load %arg2[%4, %c0] : memref<8x128xi32, #tpu.memory_space<vmem>>, vector<1x128xi32>
    %c1_i32 = arith.constant 1 : i32
    %6 = arith.addi %0, %c1_i32 : i32
    %7 = arith.index_cast %6 : i32 to index
    %8 = memref.load %arg1[%7] : memref<8xi32, #tpu.memory_space<smem>>
    %9 = arith.index_cast %8 : i32 to index
    %c0_0 = arith.constant 0 : index
    %10 = vector.load %arg2[%9, %c0_0] : memref<8x128xi32, #tpu.memory_space<vmem>>, vector<1x128xi32>
    %c2_i32 = arith.constant 2 : i32
    %11 = arith.addi %0, %c2_i32 : i32
    %12 = arith.index_cast %11 : i32 to index
    %13 = memref.load %arg1[%12] : memref<8xi32, #tpu.memory_space<smem>>
    %14 = arith.index_cast %13 : i32 to index
    %c0_1 = arith.constant 0 : index
    %15 = vector.load %arg2[%14, %c0_1] : memref<8x128xi32, #tpu.memory_space<vmem>>, vector<1x128xi32>
    %c3_i32 = arith.constant 3 : i32
    %16 = arith.addi %0, %c3_i32 : i32
    %17 = arith.index_cast %16 : i32 to index
    %18 = memref.load %arg1[%17] : memref<8xi32, #tpu.memory_space<smem>>
    %19 = arith.index_cast %18 : i32 to index
    %c0_2 = arith.constant 0 : index
    %20 = vector.load %arg2[%19, %c0_2] : memref<8x128xi32, #tpu.memory_space<vmem>>, vector<1x128xi32>
    %c4_i32 = arith.constant 4 : i32
    %21 = arith.addi %0, %c4_i32 : i32
    %22 = arith.index_cast %21 : i32 to index
    %23 = memref.load %arg1[%22] : memref<8xi32, #tpu.memory_space<smem>>
    %24 = arith.index_cast %23 : i32 to index
    %c0_3 = arith.constant 0 : index
    %25 = vector.load %arg2[%24, %c0_3] : memref<8x128xi32, #tpu.memory_space<vmem>>, vector<1x128xi32>
    %c5_i32 = arith.constant 5 : i32
    %26 = arith.addi %0, %c5_i32 : i32
    %27 = arith.index_cast %26 : i32 to index
    %28 = memref.load %arg1[%27] : memref<8xi32, #tpu.memory_space<smem>>
    %29 = arith.index_cast %28 : i32 to index
    %c0_4 = arith.constant 0 : index
    %30 = vector.load %arg2[%29, %c0_4] : memref<8x128xi32, #tpu.memory_space<vmem>>, vector<1x128xi32>
    %c6_i32 = arith.constant 6 : i32
    %31 = arith.addi %0, %c6_i32 : i32
    %32 = arith.index_cast %31 : i32 to index
    %33 = memref.load %arg1[%32] : memref<8xi32, #tpu.memory_space<smem>>
    %34 = arith.index_cast %33 : i32 to index
    %c0_5 = arith.constant 0 : index
    %35 = vector.load %arg2[%34, %c0_5] : memref<8x128xi32, #tpu.memory_space<vmem>>, vector<1x128xi32>
    %c7_i32 = arith.constant 7 : i32
    %36 = arith.addi %0, %c7_i32 : i32
    %37 = arith.index_cast %36 : i32 to index
    %38 = memref.load %arg1[%37] : memref<8xi32, #tpu.memory_space<smem>>
    %39 = arith.index_cast %38 : i32 to index
    %c0_6 = arith.constant 0 : index
    %40 = vector.load %arg2[%39, %c0_6] : memref<8x128xi32, #tpu.memory_space<vmem>>, vector<1x128xi32>
    %41 = tpu.concatenate %5, %10, %15, %20, %25, %30, %35, %40 in 0 : vector<1x128xi32>, vector<1x128xi32>, vector<1x128xi32>, vector<1x128xi32>, vector<1x128xi32>, vector<1x128xi32>, vector<1x128xi32>, vector<1x128xi32> -> vector<8x128xi32>
    %c0_7 = arith.constant 0 : index
    %c0_8 = arith.constant 0 : index
    %42 = vector.load %arg3[%c0_7, %c0_8] : memref<8x128xi32, #tpu.memory_space<vmem>>, vector<8x128xi32>
    tpu.vector_store %arg3[%c0_7, %c0_8], %41 {strides = array<i32>} : memref<8x128xi32, #tpu.memory_space<vmem>>, vector<8x128xi32>,
    return
  }
  func.func @transform_0(%arg0: i32, %arg1: memref<8xi32, #tpu.memory_space<smem>>) -> (i32, i32) {
    %c0_i32 = arith.constant 0 : i32
    %c0_i32_0 = arith.constant 0 : i32
    %c0_i32_1 = arith.constant 0 : i32
    return %c0_i32, %c0_i32_0 : i32, i32
  }
  func.func @transform_1(%arg0: i32, %arg1: memref<8xi32, #tpu.memory_space<smem>>) -> (i32, i32) {
    %c0_i32 = arith.constant 0 : i32
    %c0_i32_0 = arith.constant 0 : i32
    return %arg0, %c0_i32 : i32, i32
  }
}

</mosaic_0001>

<llo_original>
// kernel: sender.1
$region0: #{sender.1}
  #allocation0 [shape = 'u32[]', space=smem, size = 0x4, offset = 0x4, fixed_abs, tag = 'smem constant byte address 0x4 - core index']
  #allocation1 [shape = 'u32[144,128]{1,0:T(1,128)}', space=vmem, size = 0x12000, scoped, tag = 'internal scratch']
  #allocation2 [shape = 's32[1]{0}', space=sflag, size = 0x4, scoped, tag = 'scoped memory for sender.1']
  #allocation3 [shape = 'u8[512]{0}', space=smem, size = 0x200, scoped, tag = 'prefetched SMEM operand 0']
  %s0 = inlined_call_operand.vmem [shape: s32[8], index: 0, kind: input, shape index: {}]
  %s1 = inlined_call_operand.vmem [shape: s32[8,128], index: 1, kind: input, shape index: {}]
  %s2 = inlined_call_operand.vmem [shape: s32[8,128], index: 2, kind: output, shape index: {}]
  %s3 = sld [smem:[#allocation0]]
  $region14: #{sender.1} parent=0
    _
  %s5 = ssub.s32 1, %s3
  %s6 = scalar_select 0, %s5, %s3
  %s7 = sshll.u32 %s0, 4
  %s8 = int_to_ptr.vmem [resolvable:$true] %s7
  %10 = dma.vmem_to_smem %s8, 16, [#allocation3], [#allocation2]
  %11 = dma.done [#allocation2], 16
  %12 = sfence
  // Predicated region
  $region2: #{sender.1} parent=0 // pred_check
    _
  $region3: #{sender.1} parent=0 // pred_check_branch
    %14 = sbr.rel (0) target = $region5
  $region4: #{sender.1} parent=0 // pred_region
    _
  $region5: #{sender.1} parent=0 // pred_fallthru
    _
  %s15 = smul.u32 0, 8
  %s16 = sld [smem:[#allocation3 + %s15]]
  %s17 = scalar_lea.vmem %s1, %s16
  %v18 = vld [vmem:[%s17] sm:$0x1]
  %s19 = sadd.s32 %s15, 1
  %s20 = sld [smem:[#allocation3 + %s19]]
  %s21 = scalar_lea.vmem %s1, %s20
  %v22 = vld [vmem:[%s21] sm:$0x1]
  %s23 = sadd.s32 %s15, 2
  %s24 = sld [smem:[#allocation3 + %s23]]
  %s25 = scalar_lea.vmem %s1, %s24
  %v26 = vld [vmem:[%s25] sm:$0x1]
  %s27 = sadd.s32 %s15, 3
  %s28 = sld [smem:[#allocation3 + %s27]]
  %s29 = scalar_lea.vmem %s1, %s28
  %v30 = vld [vmem:[%s29] sm:$0x1]
  %s31 = sadd.s32 %s15, 4
  %s32 = sld [smem:[#allocation3 + %s31]]
  %s33 = scalar_lea.vmem %s1, %s32
  %v34 = vld [vmem:[%s33] sm:$0x1]
  %s35 = sadd.s32 %s15, 5
  %s36 = sld [smem:[#allocation3 + %s35]]
  %s37 = scalar_lea.vmem %s1, %s36
  %v38 = vld [vmem:[%s37] sm:$0x1]
  %s39 = sadd.s32 %s15, 6
  %s40 = sld [smem:[#allocation3 + %s39]]
  %s41 = scalar_lea.vmem %s1, %s40
  %v42 = vld [vmem:[%s41] sm:$0x1]
  %s43 = sadd.s32 %s15, 7
  %s44 = sld [smem:[#allocation3 + %s43]]
  %s45 = scalar_lea.vmem %s1, %s44
  %v46 = vld [vmem:[%s45] sm:$0x1]
  %v47 = vrot.slane %v22, 7
  %v48 = vrot.slane %v26, 6
  %v49 = vrot.slane %v30, 5
  %v50 = vrot.slane %v34, 4
  %v51 = vrot.slane %v38, 3
  %v52 = vrot.slane %v42, 2
  %v53 = vrot.slane %v46, 1
  %vm54 = vcmask 1040384
  %v55 = vsel %vm54, %v18, %v47
  %vm56 = vcmask 1041408
  %v57 = vsel %vm56, %v55, %v48
  %vm58 = vcmask 1042432
  %v59 = vsel %vm58, %v57, %v49
  %vm60 = vcmask 1043456
  %v61 = vsel %vm60, %v59, %v50
  %vm62 = vcmask 1044480
  %v63 = vsel %vm62, %v61, %v51
  %vm64 = vcmask 1045504
  %v65 = vsel %vm64, %v63, %v52
  %vm66 = vcmask 1046528
  %v67 = vsel %vm66, %v65, %v53
  %68 = vst [vmem:[%s2] sm:$0xff] %v67
  // Predicated region
  $region6: #{sender.1} parent=0 // pred_check
    _
  $region7: #{sender.1} parent=0 // pred_check_branch
    %70 = sbr.rel (0) target = $region9
  $region8: #{sender.1} parent=0 // pred_region
    _
  $region9: #{sender.1} parent=0 // pred_fallthru
    _
  // Predicated region
  $region10: #{sender.1} parent=0 // pred_check
    _
  $region11: #{sender.1} parent=0 // pred_check_branch
    %72 = sbr.rel (0) target = $region13
  $region12: #{sender.1} parent=0 // pred_region
    _
  $region13: #{sender.1} parent=0 // pred_fallthru
    _

</llo_original>
